<compile_context>
chip_gen: v5e
topology: v5e:2x2
jax: 0.10.0
libtpu: 0.0.40
codegen_flags: <defaults>
</compile_context>

<pallas_src>
import functools

import jax
import jax.numpy as jnp
from jax import lax
from jax.experimental import pallas as pl
from jax.experimental.pallas import tpu as pltpu


def _round_up(x, m):
    return (x + m - 1) // m * m


def _convmodule_kernel(x_ref, w_ref, b_ref, o_ref, *, K, Ho, stride, imgs):
    """Fused Conv2d (+folded BN scale) + BN bias + SiLU for a group of images.

    x_ref: (imgs, stride, Hq, WpC_pad)  bf16  stride-phase-regrouped padded input
    w_ref: (K * WpC_pad, bn)            bf16  banded weight, BN scale folded in
    b_ref: (1, bn)                      f32   folded BN bias (tiled over Wo)
    o_ref: (imgs * Ho, bn)              bf16
    """
    per_image = []
    for g in range(imgs):                              # static unroll (small)
        taps = []
        for kh in range(K):                            # static unroll
            p, q0 = kh % stride, kh // stride
            # contiguous row slice; lane dim is 128-aligned so the concat below
            # is a cheap lane-aligned copy.
            taps.append(x_ref[g, p, q0:q0 + Ho, :])            # (Ho, WpC_pad)
        per_image.append(jnp.concatenate(taps, axis=-1))       # (Ho, K*WpC_pad)
    lhs = per_image[0] if imgs == 1 else jnp.concatenate(per_image, axis=0)
    # single MXU matmul, f32 accumulation; epilogue: folded BN bias + SiLU
    y = jnp.dot(lhs, w_ref[...], preferred_element_type=jnp.float32) + b_ref[...]
    o_ref[...] = (y * jax.nn.sigmoid(y)).astype(o_ref.dtype)


def prepare_conv_module(weight, gamma, beta, run_mean, run_var, *, input_hw,
                        stride=1, padding=1, eps=1e-5):
    """One-time weight prep: fold eval-mode BN into the conv weight and build the
    banded matmul operand.  Depends only on parameters + static input spatial
    size -> compute once per weight update, reuse for every forward call."""
    H, W = input_hw
    Cout, Cin, K, K2 = weight.shape
    assert K == K2, "non-square kernels not supported"

    Hp, Wp = H + 2 * padding, W + 2 * padding
    Ho = (Hp - K) // stride + 1
    Wo = (Wp - K) // stride + 1
    WpC, WoC = Wp * Cin, Wo * Cout
    WpC_pad = _round_up(WpC, 128)          # lane-dense contraction rows

    f32 = jnp.float32
    inv_std = lax.rsqrt(run_var.astype(f32) + eps)
    scale = gamma.astype(f32) * inv_std
    bias = beta.astype(f32) - run_mean.astype(f32) * scale

    # (K_kh, K_kw, Cin, Cout), BN scale folded into output channels.
    w_kkio = jnp.transpose(weight.astype(f32) * scale[:, None, None, None],
                           (2, 3, 1, 0))
    # Banded weight via one selector einsum (no K^2 kron loop):
    #   band[kh, wp, ci, wo, co] = weight[co,ci,kh,kw]*scale[co]  iff wp == wo*s+kw
    sel = (jnp.arange(Wp)[None, :, None] ==
           (jnp.arange(Wo)[None, None, :] * stride
            + jnp.arange(K)[:, None, None])).astype(f32)          # (K_kw, Wp, Wo)
    band = jnp.einsum("kpw,hkio->hpiwo", sel, w_kkio)              # (K,Wp,Cin,Wo,Cout)
    band = band.reshape(K, WpC, WoC)
    band = jnp.pad(band, ((0, 0), (0, WpC_pad - WpC), (0, 0)))     # zero pad rows
    w_band = band.reshape(K * WpC_pad, WoC).astype(jnp.bfloat16)

    bias_row = jnp.tile(bias, Wo).reshape(1, WoC)                  # (1, WoC) f32

    geom = dict(K=K, Cin=Cin, Cout=Cout, stride=stride, padding=padding,
                H=H, W=W, Hp=Hp, Wp=Wp, Ho=Ho, Wo=Wo,
                WpC=WpC, WpC_pad=WpC_pad, WoC=WoC)
    return w_band, bias_row, geom


def conv_module_forward(x_nchw, w_band, bias_row, geom, *,
                        block_n=None, imgs_per_block=None):
    N, Cin, H, W = x_nchw.shape
    assert (Cin, H, W) == (geom["Cin"], geom["H"], geom["W"]), "geometry mismatch"
    K, S, padding = geom["K"], geom["stride"], geom["padding"]
    Hp, Wp = geom["Hp"], geom["Wp"]
    Ho, Wo, Cout = geom["Ho"], geom["Wo"], geom["Cout"]
    WpC, WpC_pad, WoC = geom["WpC"], geom["WpC_pad"], geom["WoC"]
    Hq = -(-Hp // S)                                   # rows per stride phase

    # ---- layout glue (cheap; fuses under jit) ------------------------------
    x = jnp.transpose(x_nchw, (0, 2, 3, 1))                        # NHWC
    xp = jnp.pad(x, ((0, 0),
                     (padding, padding + (Hq * S - Hp)),
                     (padding, padding),
                     (0, 0))).astype(jnp.bfloat16)                 # (N, Hq*S, Wp, Cin)
    # stride-phase row regroup: slab[n, p, q, :] = row (q*S + p) of xp
    slab = xp.reshape(N, Hq, S, WpC).transpose(0, 2, 1, 3)         # (N, S, Hq, WpC)
    slab = jnp.pad(slab, ((0, 0), (0, 0), (0, 0), (0, WpC_pad - WpC)))

    # ---- tiling ------------------------------------------------------------
    if imgs_per_block is None:
        cap = max(1, 512 // max(Ho, 1))                # keep M tile modest
        imgs_per_block = max(d for d in range(1, N + 1) if N % d == 0 and d <= cap)
    G = imgs_per_block
    assert N % G == 0
    if block_n is None:
        if WoC % 128 != 0 or WoC <= 512:
            block_n = WoC
        else:
            block_n = max(bn for bn in range(128, 513, 128) if WoC % bn == 0)
    assert WoC % block_n == 0
    num_m, num_n = N // G, WoC // block_n
    # TODO(synk): at this toy shape the grid collapses to (1,1); at production
    # sizes num_n >= 2 keeps both v7x TensorCores busy via the parallel axes.

    kernel = functools.partial(_convmodule_kernel, K=K, Ho=Ho, stride=S, imgs=G)

    out2d = pl.pallas_call(
        kernel,
        out_shape=jax.ShapeDtypeStruct((N * Ho, WoC), jnp.bfloat16),
        grid_spec=pltpu.PrefetchScalarGridSpec(
            num_scalar_prefetch=0,
            grid=(num_m, num_n),
            in_specs=[
                pl.BlockSpec((G, S, Hq, WpC_pad), lambda m, n: (m, 0, 0, 0)),
                pl.BlockSpec((K * WpC_pad, block_n), lambda m, n: (0, n)),
                pl.BlockSpec((1, block_n), lambda m, n: (0, n)),
            ],
            out_specs=pl.BlockSpec((G * Ho, block_n), lambda m, n: (m, n)),
        ),
        compiler_params=pltpu.CompilerParams(
            dimension_semantics=("parallel", "parallel"),
            vmem_limit_bytes=32 * 1024 * 1024,
        ),
    )(slab, w_band, bias_row)

    out = out2d.reshape(N, Ho, Wo, Cout)
    return jnp.transpose(out, (0, 3, 1, 2))            # NCHW, bf16 activations


def reference_forward(x, w, gamma, beta, rm, rv, *, stride=1, padding=1, eps=1e-5):
    y = lax.conv_general_dilated(
        x.astype(jnp.float32), w.astype(jnp.float32),
        window_strides=(stride, stride),
        padding=[(padding, padding), (padding, padding)],
        dimension_numbers=("NCHW", "OIHW", "NCHW"))
    y = (y - rm[None, :, None, None]) / jnp.sqrt(rv[None, :, None, None] + eps)
    y = y * gamma[None, :, None, None] + beta[None, :, None, None]
    return y * jax.nn.sigmoid(y)


if __name__ == "__main__":
    # ConvModule(in_channels=4, out_channels=8, kernel_size=3, stride=1, padding=1)
    N, Cin, H, W = 2, 4, 16, 16
    Cout, K, stride, padding = 8, 3, 1, 1

    key = jax.random.PRNGKey(0)
    kx, kw, kg, kb, km, kv = jax.random.split(key, 6)

    x = jax.random.normal(kx, (N, Cin, H, W), dtype=jnp.float32)
    weight = jax.random.normal(kw, (Cout, Cin, K, K), dtype=jnp.float32) * 0.1
    gamma = jax.random.normal(kg, (Cout,), dtype=jnp.float32) * 0.1 + 1.0
    beta = jax.random.normal(kb, (Cout,), dtype=jnp.float32) * 0.1
    run_mean = jax.random.normal(km, (Cout,), dtype=jnp.float32) * 0.1
    run_var = jax.random.uniform(kv, (Cout,), dtype=jnp.float32,
                                 minval=0.5, maxval=1.5)

    # One-time weight prep (banded weight + folded BN), reused across calls.
    w_band, bias_row, geom = prepare_conv_module(
        weight, gamma, beta, run_mean, run_var,
        input_hw=(H, W), stride=stride, padding=padding)

    fwd = jax.jit(functools.partial(conv_module_forward, geom=geom))
    out = fwd(x, w_band, bias_row)
    out = jax.block_until_ready(out)

    ref = reference_forward(x, weight, gamma, beta, run_mean, run_var,
                            stride=stride, padding=padding)
    assert out.shape == (N, Cout, H, W), out.shape
    # bf16 matmul operands + bf16 output -> relaxed tolerance vs f32 reference
    assert jnp.allclose(out.astype(jnp.float32), ref, atol=3e-2, rtol=3e-2), \
        "mismatch vs reference"

    print("KERNEL_OK")
</pallas_src>

<mosaic_0001>
module attributes {stable_mosaic.version = 11 : i64} {
  func.func @_convmodule_kernel(%arg0: i32, %arg1: i32, %arg2: memref<2x1x18x128xbf16, #tpu.memory_space<vmem>>, %arg3: memref<384x128xbf16, #tpu.memory_space<vmem>>, %arg4: memref<1x128xf32, #tpu.memory_space<vmem>>, %arg5: memref<32x128xbf16, #tpu.memory_space<vmem>>) attributes {dimension_semantics = [#tpu.dimension_semantics<parallel>, #tpu.dimension_semantics<parallel>], iteration_bounds = array<i64: 1, 1>, scalar_prefetch = 0 : i64, scratch_operands = 0 : i64, tpu.core_type = #tpu.core_type<tc>, window_params = [{transform_indices = @transform_0, window_bounds = array<i64: 2, 1, 18, 128>}, {transform_indices = @transform_1, window_bounds = array<i64: 384, 128>}, {transform_indices = @transform_2, window_bounds = array<i64: 1, 128>}, {transform_indices = @transform_3, window_bounds = array<i64: 32, 128>}]} {
    %c0 = arith.constant 0 : index
    %c0_0 = arith.constant 0 : index
    %c0_1 = arith.constant 0 : index
    %c0_2 = arith.constant 0 : index
    %0 = vector.load %arg2[%c0, %c0_0, %c0_1, %c0_2] : memref<2x1x18x128xbf16, #tpu.memory_space<vmem>>, vector<1x1x16x128xbf16>
    %1 = vector.shape_cast %0 : vector<1x1x16x128xbf16> to vector<16x128xbf16>
    %c0_3 = arith.constant 0 : index
    %c0_4 = arith.constant 0 : index
    %c1 = arith.constant 1 : index
    %c0_5 = arith.constant 0 : index
    %2 = vector.load %arg2[%c0_3, %c0_4, %c1, %c0_5] : memref<2x1x18x128xbf16, #tpu.memory_space<vmem>>, vector<1x1x16x128xbf16>
    %3 = vector.shape_cast %2 : vector<1x1x16x128xbf16> to vector<16x128xbf16>
    %c0_6 = arith.constant 0 : index
    %c0_7 = arith.constant 0 : index
    %c2 = arith.constant 2 : index
    %c0_8 = arith.constant 0 : index
    %4 = vector.load %arg2[%c0_6, %c0_7, %c2, %c0_8] : memref<2x1x18x128xbf16, #tpu.memory_space<vmem>>, vector<1x1x16x128xbf16>
    %5 = vector.shape_cast %4 : vector<1x1x16x128xbf16> to vector<16x128xbf16>
    %6 = tpu.concatenate %1, %3, %5 in 1 : vector<16x128xbf16>, vector<16x128xbf16>, vector<16x128xbf16> -> vector<16x384xbf16>
    %c1_9 = arith.constant 1 : index
    %c0_10 = arith.constant 0 : index
    %c0_11 = arith.constant 0 : index
    %c0_12 = arith.constant 0 : index
    %7 = vector.load %arg2[%c1_9, %c0_10, %c0_11, %c0_12] : memref<2x1x18x128xbf16, #tpu.memory_space<vmem>>, vector<1x1x16x128xbf16>
    %8 = vector.shape_cast %7 : vector<1x1x16x128xbf16> to vector<16x128xbf16>
    %c1_13 = arith.constant 1 : index
    %c0_14 = arith.constant 0 : index
    %c1_15 = arith.constant 1 : index
    %c0_16 = arith.constant 0 : index
    %9 = vector.load %arg2[%c1_13, %c0_14, %c1_15, %c0_16] : memref<2x1x18x128xbf16, #tpu.memory_space<vmem>>, vector<1x1x16x128xbf16>
    %10 = vector.shape_cast %9 : vector<1x1x16x128xbf16> to vector<16x128xbf16>
    %c1_17 = arith.constant 1 : index
    %c0_18 = arith.constant 0 : index
    %c2_19 = arith.constant 2 : index
    %c0_20 = arith.constant 0 : index
    %11 = vector.load %arg2[%c1_17, %c0_18, %c2_19, %c0_20] : memref<2x1x18x128xbf16, #tpu.memory_space<vmem>>, vector<1x1x16x128xbf16>
    %12 = vector.shape_cast %11 : vector<1x1x16x128xbf16> to vector<16x128xbf16>
    %13 = tpu.concatenate %8, %10, %12 in 1 : vector<16x128xbf16>, vector<16x128xbf16>, vector<16x128xbf16> -> vector<16x384xbf16>
    %14 = tpu.concatenate %6, %13 in 0 : vector<16x384xbf16>, vector<16x384xbf16> -> vector<32x384xbf16>
    %c0_21 = arith.constant 0 : index
    %c0_22 = arith.constant 0 : index
    %15 = vector.load %arg3[%c0_21, %c0_22] : memref<384x128xbf16, #tpu.memory_space<vmem>>, vector<384x128xbf16>
    %cst = arith.constant dense<0.000000e+00> : vector<32x128xf32>
    %16 = tpu.matmul %14, %15, %cst {dimension_numbers = #tpu.dot_dimension_numbers<[1], [0], [0], [1], [0, 0, 1, 1], [], []>} : vector<32x384xbf16>, vector<384x128xbf16>, vector<32x128xf32> -> vector<32x128xf32>
    %c0_23 = arith.constant 0 : index
    %c0_24 = arith.constant 0 : index
    %17 = vector.load %arg4[%c0_23, %c0_24] : memref<1x128xf32, #tpu.memory_space<vmem>>, vector<1x128xf32>
    %18 = vector.broadcast %17 : vector<1x128xf32> to vector<32x128xf32>
    %19 = arith.addf %16, %18 : vector<32x128xf32>
    %20 = arith.negf %19 : vector<32x128xf32>
    %21 = math.exp %20 : vector<32x128xf32>
    %cst_25 = arith.constant 1.000000e+00 : f32
    %22 = vector.broadcast %cst_25 : f32 to vector<32x128xf32>
    %23 = arith.addf %22, %21 : vector<32x128xf32>
    %24 = arith.divf %22, %23 : vector<32x128xf32>
    %25 = arith.mulf %19, %24 : vector<32x128xf32>
    %26 = arith.truncf %25 : vector<32x128xf32> to vector<32x128xbf16>
    %c0_26 = arith.constant 0 : index
    %c0_27 = arith.constant 0 : index
    %27 = vector.load %arg5[%c0_26, %c0_27] : memref<32x128xbf16, #tpu.memory_space<vmem>>, vector<32x128xbf16>
    tpu.vector_store %arg5[%c0_26, %c0_27], %26 {strides = array<i32>} : memref<32x128xbf16, #tpu.memory_space<vmem>>, vector<32x128xbf16>,
    return
  }
  func.func @transform_0(%arg0: i32, %arg1: i32) -> (i32, i32, i32, i32) {
    %c0_i32 = arith.constant 0 : i32
    %c0_i32_0 = arith.constant 0 : i32
    %c0_i32_1 = arith.constant 0 : i32
    %c0_i32_2 = arith.constant 0 : i32
    return %arg0, %c0_i32, %c0_i32_0, %c0_i32_1 : i32, i32, i32, i32
  }
  func.func @transform_1(%arg0: i32, %arg1: i32) -> (i32, i32) {
    %c0_i32 = arith.constant 0 : i32
    %c0_i32_0 = arith.constant 0 : i32
    return %c0_i32, %arg1 : i32, i32
  }
  func.func @transform_2(%arg0: i32, %arg1: i32) -> (i32, i32) {
    %c0_i32 = arith.constant 0 : i32
    %c0_i32_0 = arith.constant 0 : i32
    return %c0_i32, %arg1 : i32, i32
  }
  func.func @transform_3(%arg0: i32, %arg1: i32) -> (i32, i32) {
    %c0_i32 = arith.constant 0 : i32
    return %arg0, %arg1 : i32, i32
  }
}

</mosaic_0001>

<llo_original>
// kernel: conv_module_forward.1
$region0: #{conv_module_forward.1}
  #allocation0 [shape = 'u32[]', space=smem, size = 0x4, offset = 0x4, fixed_abs, tag = 'smem constant byte address 0x4 - core index']
  #allocation1 [shape = 'u32[72,128]{1,0:T(1,128)}', space=vmem, size = 0x9000, scoped, tag = 'internal scratch']
  %s0 = inlined_call_operand.vmem [shape: bf16[2,1,18,128], index: 0, kind: input, shape index: {}]
  %s1 = inlined_call_operand.vmem [shape: bf16[384,128], index: 1, kind: input, shape index: {}]
  %s2 = inlined_call_operand.vmem [shape: f32[1,128], index: 2, kind: input, shape index: {}]
  %s3 = inlined_call_operand.vmem [shape: bf16[32,128], index: 3, kind: output, shape index: {}]
  %s4 = sld [smem:[#allocation0]]
  $region22: #{conv_module_forward.1} parent=0
    _
  %s6 = ssub.s32 1, %s4
  %s7 = scalar_select 0, %s6, %s4
  // Predicated region
  $region2: #{conv_module_forward.1} parent=0 // pred_check
    _
  $region3: #{conv_module_forward.1} parent=0 // pred_check_branch
    %9 = sbr.rel (0) target = $region5
  $region4: #{conv_module_forward.1} parent=0 // pred_region
    _
  $region5: #{conv_module_forward.1} parent=0 // pred_fallthru
    _
  // Predicated region
  $region6: #{conv_module_forward.1} parent=0 // pred_check
    _
  $region7: #{conv_module_forward.1} parent=0 // pred_check_branch
    %11 = sbr.rel (0) target = $region9
  $region8: #{conv_module_forward.1} parent=0 // pred_region
    _
  $region9: #{conv_module_forward.1} parent=0 // pred_fallthru
    _
  // Predicated region
  $region10: #{conv_module_forward.1} parent=0 // pred_check
    _
  $region11: #{conv_module_forward.1} parent=0 // pred_check_branch
    %13 = sbr.rel (0) target = $region13
  $region12: #{conv_module_forward.1} parent=0 // pred_region
    _
  $region13: #{conv_module_forward.1} parent=0 // pred_fallthru
    _
  %v14 = vld [vmem:[%s0] sm:$0xf]
  %v15 = vld [vmem:[%s0 + $0x4] sm:$0xf]
  %v16 = vld [vmem:[%s0 + $0x8] sm:$0x1]
  %v17 = vld [vmem:[%s0] sm:$0xe]
  %v20 = vunpack.c.l.b16 %v14
  %v21 = vunpack.c.l.b16 %v15
  %v22 = vpack.c.b16 %v21, %v20
  %v25 = vunpack.c.l.b16 %v16
  %v26 = vpack.c.b16 %v25, %v25
  %vm27 = vsmask.f32 7424
  %v29 = vshrl.u32 %v22, 16
  %v31 = vshll.u32 %v22, 16
  %v33 = vrot.slane %v31, 1
  %v34 = vor.u32 %v29, %v33
  %v36 = vshll.u32 %v26, 16
  %v38 = vrot.slane %v36, 1
  %v39 = vsel %vm27, %v34, %v38
  %v42 = vunpack.c.l.b16 %v17
  %v43 = vpack.c.b16 %v21, %v42
  %vm44 = vcmask 1046528
  %v45 = vrot.slane %v43, 1
  %v46 = vrot.slane %v26, 1
  %v47 = vsel %vm44, %v45, %v46
  %s49 = scalar_lea.vmem %s0, 12
  %v50 = vld [vmem:[%s49] sm:$0xf]
  %v51 = vld [vmem:[%s49 + $0x4] sm:$0xf]
  %v52 = vld [vmem:[%s49 + $0x8] sm:$0x1]
  %v53 = vld [vmem:[%s49] sm:$0xe]
  %v56 = vunpack.c.l.b16 %v50
  %v57 = vunpack.c.l.b16 %v51
  %v58 = vpack.c.b16 %v57, %v56
  %v61 = vunpack.c.l.b16 %v52
  %v62 = vpack.c.b16 %v61, %v61
  %v64 = vshrl.u32 %v58, 16
  %v66 = vshll.u32 %v58, 16
  %v68 = vrot.slane %v66, 1
  %v69 = vor.u32 %v64, %v68
  %v71 = vshll.u32 %v62, 16
  %v73 = vrot.slane %v71, 1
  %v74 = vsel %vm27, %v69, %v73
  %v77 = vunpack.c.l.b16 %v53
  %v78 = vpack.c.b16 %v57, %v77
  %v79 = vrot.slane %v78, 1
  %v80 = vrot.slane %v62, 1
  %v81 = vsel %vm44, %v79, %v80
  %v83 = vld [vmem:[%s1] sm:$0xf]
  %v84 = vld [vmem:[%s1 + $0x4] sm:$0xf]
  %v85 = vld [vmem:[%s1 + $0x8] sm:$0xf]
  %v86 = vld [vmem:[%s1 + $0xc] sm:$0xf]
  %v87 = vld [vmem:[%s1 + $0x10] sm:$0xf]
  %v88 = vld [vmem:[%s1 + $0x14] sm:$0xf]
  %v89 = vld [vmem:[%s1 + $0x18] sm:$0xf]
  %v90 = vld [vmem:[%s1 + $0x1c] sm:$0xf]
  %v91 = vld [vmem:[%s1 + $0x20] sm:$0xf]
  %v92 = vld [vmem:[%s1 + $0x24] sm:$0xf]
  %v93 = vld [vmem:[%s1 + $0x28] sm:$0xf]
  %v94 = vld [vmem:[%s1 + $0x2c] sm:$0xf]
  %v95 = vld [vmem:[%s1 + $0x30] sm:$0xf]
  %v96 = vld [vmem:[%s1 + $0x34] sm:$0xf]
  %v97 = vld [vmem:[%s1 + $0x38] sm:$0xf]
  %v98 = vld [vmem:[%s1 + $0x3c] sm:$0xf]
  %v99 = vld [vmem:[%s1 + $0x40] sm:$0xf]
  %v100 = vld [vmem:[%s1 + $0x44] sm:$0xf]
  %v101 = vld [vmem:[%s1 + $0x48] sm:$0xf]
  %v102 = vld [vmem:[%s1 + $0x4c] sm:$0xf]
  %v103 = vld [vmem:[%s1 + $0x50] sm:$0xf]
  %v104 = vld [vmem:[%s1 + $0x54] sm:$0xf]
  %v105 = vld [vmem:[%s1 + $0x58] sm:$0xf]
  %v106 = vld [vmem:[%s1 + $0x5c] sm:$0xf]
  %v107 = vld [vmem:[%s1 + $0x60] sm:$0xf]
  %v108 = vld [vmem:[%s1 + $0x64] sm:$0xf]
  %v109 = vld [vmem:[%s1 + $0x68] sm:$0xf]
  %v110 = vld [vmem:[%s1 + $0x6c] sm:$0xf]
  %v111 = vld [vmem:[%s1 + $0x70] sm:$0xf]
  %v112 = vld [vmem:[%s1 + $0x74] sm:$0xf]
  %v113 = vld [vmem:[%s1 + $0x78] sm:$0xf]
  %v114 = vld [vmem:[%s1 + $0x7c] sm:$0xf]
  %v115 = vld [vmem:[%s1 + $0x80] sm:$0xf]
  %v116 = vld [vmem:[%s1 + $0x84] sm:$0xf]
  %v117 = vld [vmem:[%s1 + $0x88] sm:$0xf]
  %v118 = vld [vmem:[%s1 + $0x8c] sm:$0xf]
  %v119 = vld [vmem:[%s1 + $0x90] sm:$0xf]
  %v120 = vld [vmem:[%s1 + $0x94] sm:$0xf]
  %v121 = vld [vmem:[%s1 + $0x98] sm:$0xf]
  %v122 = vld [vmem:[%s1 + $0x9c] sm:$0xf]
  %v123 = vld [vmem:[%s1 + $0xa0] sm:$0xf]
  %v124 = vld [vmem:[%s1 + $0xa4] sm:$0xf]
  %v125 = vld [vmem:[%s1 + $0xa8] sm:$0xf]
  %v126 = vld [vmem:[%s1 + $0xac] sm:$0xf]
  %v127 = vld [vmem:[%s1 + $0xb0] sm:$0xf]
  %v128 = vld [vmem:[%s1 + $0xb4] sm:$0xf]
  %v129 = vld [vmem:[%s1 + $0xb8] sm:$0xf]
  %v130 = vld [vmem:[%s1 + $0xbc] sm:$0xf]
  %v131 = vld [vmem:[%s2] sm:$0x1]
  %v133 = vperm.slane %v131, 0
  %v183 = vunpack.c.l.b16 %v83
  %v184 = vunpack.c.l.b16 %v84
  %v185 = vunpack.c.l.b16 %v85
  %v186 = vunpack.c.l.b16 %v86
  %v187 = vunpack.c.l.b16 %v87
  %v188 = vunpack.c.l.b16 %v88
  %v189 = vunpack.c.l.b16 %v89
  %v190 = vunpack.c.l.b16 %v90
  %v191 = vunpack.c.l.b16 %v91
  %v192 = vunpack.c.l.b16 %v92
  %v193 = vunpack.c.l.b16 %v93
  %v194 = vunpack.c.l.b16 %v94
  %v195 = vunpack.c.l.b16 %v95
  %v196 = vunpack.c.l.b16 %v96
  %v197 = vunpack.c.l.b16 %v97
  %v198 = vunpack.c.l.b16 %v98
  %v199 = vunpack.c.l.b16 %v99
  %v200 = vunpack.c.l.b16 %v100
  %v201 = vunpack.c.l.b16 %v101
  %v202 = vunpack.c.l.b16 %v102
  %v203 = vunpack.c.l.b16 %v103
  %v204 = vunpack.c.l.b16 %v104
  %v205 = vunpack.c.l.b16 %v105
  %v206 = vunpack.c.l.b16 %v106
  %v207 = vunpack.c.l.b16 %v107
  %v208 = vunpack.c.l.b16 %v108
  %v209 = vunpack.c.l.b16 %v109
  %v210 = vunpack.c.l.b16 %v110
  %v211 = vunpack.c.l.b16 %v111
  %v212 = vunpack.c.l.b16 %v112
  %v213 = vunpack.c.l.b16 %v113
  %v214 = vunpack.c.l.b16 %v114
  %v215 = vunpack.c.l.b16 %v115
  %v216 = vunpack.c.l.b16 %v116
  %v217 = vunpack.c.l.b16 %v117
  %v218 = vunpack.c.l.b16 %v118
  %v219 = vunpack.c.l.b16 %v119
  %v220 = vunpack.c.l.b16 %v120
  %v221 = vunpack.c.l.b16 %v121
  %v222 = vunpack.c.l.b16 %v122
  %v223 = vunpack.c.l.b16 %v123
  %v224 = vunpack.c.l.b16 %v124
  %v225 = vunpack.c.l.b16 %v125
  %v226 = vunpack.c.l.b16 %v126
  %v227 = vunpack.c.l.b16 %v127
  %v228 = vunpack.c.l.b16 %v128
  %v229 = vunpack.c.l.b16 %v129
  %v230 = vunpack.c.l.b16 %v130
  %v231 = vpack.c.b16 %v184, %v183
  %v232 = vpack.c.b16 %v186, %v185
  %v233 = vpack.c.b16 %v188, %v187
  %v234 = vpack.c.b16 %v190, %v189
  %v235 = vpack.c.b16 %v192, %v191
  %v236 = vpack.c.b16 %v194, %v193
  %v237 = vpack.c.b16 %v196, %v195
  %v238 = vpack.c.b16 %v198, %v197
  %v239 = vpack.c.b16 %v200, %v199
  %v240 = vpack.c.b16 %v202, %v201
  %v241 = vpack.c.b16 %v204, %v203
  %v242 = vpack.c.b16 %v206, %v205
  %v243 = vpack.c.b16 %v208, %v207
  %v244 = vpack.c.b16 %v210, %v209
  %v245 = vpack.c.b16 %v212, %v211
  %v246 = vpack.c.b16 %v214, %v213
  %v247 = vpack.c.b16 %v216, %v215
  %v248 = vpack.c.b16 %v218, %v217
  %v249 = vpack.c.b16 %v220, %v219
  %v250 = vpack.c.b16 %v222, %v221
  %v251 = vpack.c.b16 %v224, %v223
  %v252 = vpack.c.b16 %v226, %v225
  %v253 = vpack.c.b16 %v228, %v227
  %v254 = vpack.c.b16 %v230, %v229
  %279 = vmatpush.bf16.msra.mxu0 %v238
  %280 = vmatpush.bf16.msra.mxu0 %v237
  %281 = vmatpush.bf16.msra.mxu0 %v236
  %282 = vmatpush.bf16.msra.mxu0 %v235
  %283 = vmatpush.bf16.msra.mxu0 %v234
  %284 = vmatpush.bf16.msra.mxu0 %v233
  %285 = vmatpush.bf16.msra.mxu0 %v232
  %286 = vmatpush.bf16.msra.mxu0 %v231
  %287 = vmatmul.bf16.gmra.mxu0 %v22
  %v288 = vpop.f32.mrf.mxu0
  %v289 = vadd.f32 %v133, %v288
  %v290 = vpop.f32.mrf.mxu0
  %v291 = vadd.f32 %v133, %v290
  %292 = vmatmul.bf16.gmra.mxu0 %v58
  %v293 = vpop.f32.mrf.mxu0
  %v294 = vadd.f32 %v133, %v293
  %v295 = vpop.f32.mrf.mxu0
  %v296 = vadd.f32 %v133, %v295
  %297 = vdwg.mxu0
  %298 = vmatpush.bf16.msra.mxu0 %v246
  %299 = vmatpush.bf16.msra.mxu0 %v245
  %300 = vmatpush.bf16.msra.mxu0 %v244
  %301 = vmatpush.bf16.msra.mxu0 %v243
  %302 = vmatpush.bf16.msra.mxu0 %v242
  %303 = vmatpush.bf16.msra.mxu0 %v241
  %304 = vmatpush.bf16.msra.mxu0 %v240
  %305 = vmatpush.bf16.msra.mxu0 %v239
  %306 = vmatmul.bf16.gmra.mxu0 %v39
  %v307 = vpop.f32.mrf.mxu0
  %v308 = vadd.f32 %v289, %v307
  %v309 = vpop.f32.mrf.mxu0
  %v310 = vadd.f32 %v291, %v309
  %311 = vmatmul.bf16.gmra.mxu0 %v74
  %v312 = vpop.f32.mrf.mxu0
  %v313 = vadd.f32 %v294, %v312
  %v314 = vpop.f32.mrf.mxu0
  %v315 = vadd.f32 %v296, %v314
  %316 = vdwg.mxu0
  %317 = vmatpush.bf16.msra.mxu0 %v254
  %318 = vmatpush.bf16.msra.mxu0 %v253
  %319 = vmatpush.bf16.msra.mxu0 %v252
  %320 = vmatpush.bf16.msra.mxu0 %v251
  %321 = vmatpush.bf16.msra.mxu0 %v250
  %322 = vmatpush.bf16.msra.mxu0 %v249
  %323 = vmatpush.bf16.msra.mxu0 %v248
  %324 = vmatpush.bf16.msra.mxu0 %v247
  %325 = vmatmul.bf16.gmra.mxu0 %v47
  %v326 = vpop.f32.mrf.mxu0
  %v327 = vadd.f32 %v308, %v326
  %v328 = vpop.f32.mrf.mxu0
  %v329 = vadd.f32 %v310, %v328
  %330 = vmatmul.bf16.gmra.mxu0 %v81
  %v331 = vpop.f32.mrf.mxu0
  %v332 = vadd.f32 %v313, %v331
  %v333 = vpop.f32.mrf.mxu0
  %v334 = vadd.f32 %v315, %v333
  %335 = vdwg.mxu0
  %v336 = vxor.u32 %v327, 2147483648
  %v337 = vxor.u32 %v329, 2147483648
  %v338 = vxor.u32 %v332, 2147483648
  %v339 = vxor.u32 %v334, 2147483648
  %v340 = vmul.f32 %v336, 1.442695
  %v341 = vpow.pop %v340
  %v342 = vmul.f32 %v337, 1.442695
  %v343 = vpow.pop %v342
  %v344 = vmul.f32 %v338, 1.442695
  %v345 = vpow.pop %v344
  %v346 = vmul.f32 %v339, 1.442695
  %v347 = vpow.pop %v346
  %v348 = vadd.f32 %v341, 1.0
  %v349 = vadd.f32 %v343, 1.0
  %v350 = vadd.f32 %v345, 1.0
  %v351 = vadd.f32 %v347, 1.0
  %v352 = vrcp.pop %v348
  %v353 = vmul.f32 %v348, %v352
  %v354 = vsub.f32 1.0, %v353
  %v355 = vmul.f32 %v352, %v354
  %v356 = vadd.f32 %v352, %v355
  %vm357 = vweird.f32 %v348
  %vm358 = vweird.f32 %v352
  %vm359 = vmor %vm357, %vm358
  %v360 = vsel %vm359, %v352, %v356
  %v361 = vand.u32 2147483647, %v348
  %vm362 = vcmp.eq.f32.partialorder %v361, 8.507059e+37
  %v363 = vand.u32 %v348, 2147483648
  %v364 = vor.u32 1.1754944e-38, %v363
  %v365 = vsel %vm362, %v364, %v360
  %v366 = vmul.f32 1.0, %v365
  %v367 = vrcp.pop %v349
  %v368 = vmul.f32 %v349, %v367
  %v369 = vsub.f32 1.0, %v368
  %v370 = vmul.f32 %v367, %v369
  %v371 = vadd.f32 %v367, %v370
  %vm372 = vweird.f32 %v349
  %vm373 = vweird.f32 %v367
  %vm374 = vmor %vm372, %vm373
  %v375 = vsel %vm374, %v367, %v371
  %v376 = vand.u32 2147483647, %v349
  %vm377 = vcmp.eq.f32.partialorder %v376, 8.507059e+37
  %v378 = vand.u32 %v349, 2147483648
  %v379 = vor.u32 1.1754944e-38, %v378
  %v380 = vsel %vm377, %v379, %v375
  %v381 = vmul.f32 1.0, %v380
  %v382 = vrcp.pop %v350
  %v383 = vmul.f32 %v350, %v382
  %v384 = vsub.f32 1.0, %v383
  %v385 = vmul.f32 %v382, %v384
  %v386 = vadd.f32 %v382, %v385
  %vm387 = vweird.f32 %v350
  %vm388 = vweird.f32 %v382
  %vm389 = vmor %vm387, %vm388
  %v390 = vsel %vm389, %v382, %v386
  %v391 = vand.u32 2147483647, %v350
  %vm392 = vcmp.eq.f32.partialorder %v391, 8.507059e+37
  %v393 = vand.u32 %v350, 2147483648
  %v394 = vor.u32 1.1754944e-38, %v393
  %v395 = vsel %vm392, %v394, %v390
  %v396 = vmul.f32 1.0, %v395
  %v397 = vrcp.pop %v351
  %v398 = vmul.f32 %v351, %v397
  %v399 = vsub.f32 1.0, %v398
  %v400 = vmul.f32 %v397, %v399
  %v401 = vadd.f32 %v397, %v400
  %vm402 = vweird.f32 %v351
  %vm403 = vweird.f32 %v397
  %vm404 = vmor %vm402, %vm403
  %v405 = vsel %vm404, %v397, %v401
  %v406 = vand.u32 2147483647, %v351
  %vm407 = vcmp.eq.f32.partialorder %v406, 8.507059e+37
  %v408 = vand.u32 %v351, 2147483648
  %v409 = vor.u32 1.1754944e-38, %v408
  %v410 = vsel %vm407, %v409, %v405
  %v411 = vmul.f32 1.0, %v410
  %v412 = vmul.f32 %v327, %v366
  %v413 = vmul.f32 %v329, %v381
  %v414 = vmul.f32 %v332, %v396
  %v415 = vmul.f32 %v334, %v411
  %v416 = vpack.c.bf16 %v412, %v412
  %v417 = vpack.c.bf16 %v413, %v413
  %v418 = vpack.c.bf16 %v414, %v414
  %v419 = vpack.c.bf16 %v415, %v415
  %420 = vst [vmem:[%s3] sm:$0xf] %v416
  %421 = vst [vmem:[%s3 + $0x4] sm:$0xf] %v417
  %422 = vst [vmem:[%s3 + $0x8] sm:$0xf] %v418
  %423 = vst [vmem:[%s3 + $0xc] sm:$0xf] %v419
  // Predicated region
  $region14: #{conv_module_forward.1} parent=0 // pred_check
    _
  $region15: #{conv_module_forward.1} parent=0 // pred_check_branch
    %425 = sbr.rel (0) target = $region17
  $region16: #{conv_module_forward.1} parent=0 // pred_region
    _
  $region17: #{conv_module_forward.1} parent=0 // pred_fallthru
    _
  // Predicated region
  $region18: #{conv_module_forward.1} parent=0 // pred_check
    _
  $region19: #{conv_module_forward.1} parent=0 // pred_check_branch
    %427 = sbr.rel (0) target = $region21
  $region20: #{conv_module_forward.1} parent=0 // pred_region
    _
  $region21: #{conv_module_forward.1} parent=0 // pred_fallthru
    _

</llo_original>
